<compile_context>
chip_gen: v6e
topology: v6e:2x2x1
jax: 0.10.0
libtpu: 0.0.40
codegen_flags: <defaults>
</compile_context>

<pallas_src>
import functools

import jax
import jax.numpy as jnp
from jax.experimental import pallas as pl
from jax.experimental.pallas import tpu as pltpu

LANE = 128


def _round_up(n, m):
    return ((n + m - 1) // m) * m


def _seq_module_kernel(
    x_ref,      # (TR, d_in_p)          bf16
    wenc_ref,   # (d_in_p, d_model_p)   bf16
    benc_ref,   # (1, d_model_p)        f32
    gamma_ref,  # (1, d_model_p)        f32  (zero in padded columns)
    beta_ref,   # (1, d_model_p)        f32
    w1_ref,     # (d_model_p, d_ff_p)   bf16
    b1_ref,     # (1, d_ff_p)           f32
    w2_ref,     # (d_ff_p, d_model_p)   bf16
    b2_ref,     # (1, d_model_p)        f32
    wdec_ref,   # (d_model_p, d_out_p)  bf16
    bdec_ref,   # (1, d_out_p)          f32
    o_ref,      # (TR, d_out_p)         f32
    *,
    d_model: int,
):
    # Hoisted single reads of the small resident vectors (kept in f32).
    b_enc = benc_ref[...]
    gamma = gamma_ref[...]
    beta = beta_ref[...]
    b1 = b1_ref[...]
    b2 = b2_ref[...]
    b_dec = bdec_ref[...]

    # ---- encoder: Linear(d_input -> d_model); bf16 MXU operands, f32 accumulation ----
    x = x_ref[...]
    h = jnp.dot(x, wenc_ref[...], preferred_element_type=jnp.float32) + b_enc

    # ---- model: pre-LayerNorm residual MLP block (stats / elementwise in f32) ----
    # Padded d_model columns of h are exactly zero (zero-padded weights & bias), so
    # sums over the padded axis equal sums over the true d_model columns.
    d_model_p = h.shape[-1]
    inv_d = 1.0 / float(d_model)
    mean = jnp.sum(h, axis=-1, keepdims=True) * inv_d
    if d_model_p != d_model:
        col = jax.lax.broadcasted_iota(jnp.int32, (1, d_model_p), 1)
        centered = jnp.where(col < d_model, h - mean, 0.0)
    else:
        centered = h - mean
    var = jnp.sum(centered * centered, axis=-1, keepdims=True) * inv_d
    inv = jax.lax.rsqrt(var + 1e-5)
    ln = centered * inv * gamma + beta  # padded cols -> 0 (gamma/beta zero-padded)

    u = jnp.dot(ln.astype(jnp.bfloat16), w1_ref[...],
                preferred_element_type=jnp.float32) + b1
    # tanh-approx GELU (lowers to EUP tanh).
    # TODO(synk): use exact erf GELU if bit-parity with torch.nn.GELU default is required.
    u = jax.nn.gelu(u, approximate=True)
    m = h + jnp.dot(u.astype(jnp.bfloat16), w2_ref[...],
                    preferred_element_type=jnp.float32) + b2

    # ---- decoder: Linear(d_model -> d_output) ----
    y = jnp.dot(m.astype(jnp.bfloat16), wdec_ref[...],
                preferred_element_type=jnp.float32) + b_dec
    o_ref[...] = y.astype(o_ref.dtype)


def _resident_spec(shape):
    """BlockSpec for a grid-invariant (resident) operand: single-buffered VMEM copy."""
    index_map = lambda i: (0,) * len(shape)
    try:
        return pl.BlockSpec(shape, index_map, pipeline_mode=pl.Buffered(1))
    except (TypeError, AttributeError):
        # Older JAX without pipeline_mode: fall back to default (double-buffered).
        return pl.BlockSpec(shape, index_map)


@functools.partial(jax.jit, static_argnames=("row_tile",))
def sequence_module_forward(x, params, *, row_tile=256):
    """x: (B, L, d_input) float32 -> (B, L, d_output) float32."""
    B, L, d_in = x.shape
    d_model = params["w_enc"].shape[1]
    d_ff = params["w1"].shape[1]
    d_out = params["w_dec"].shape[1]

    # Lane-dense padded feature dims (multiples of 128).
    d_in_p = _round_up(d_in, LANE)
    d_model_p = _round_up(d_model, LANE)
    d_ff_p = _round_up(d_ff, LANE)
    d_out_p = _round_up(d_out, LANE)

    rows = B * L
    tr = _round_up(min(row_tile, _round_up(rows, 16)), 16)  # multiple of 16 (bf16 tiles)
    rows_p = _round_up(rows, tr)

    def pad2(a, r, c, dtype):
        return jnp.pad(a, ((0, r - a.shape[0]), (0, c - a.shape[1]))).astype(dtype)

    # In production the weight padding/casting would be done once outside the step;
    # here it is cheap and keeps the demo self-contained.
    x2d = pad2(x.reshape(rows, d_in), rows_p, d_in_p, jnp.bfloat16)
    w_enc = pad2(params["w_enc"], d_in_p, d_model_p, jnp.bfloat16)
    b_enc = pad2(params["b_enc"], 1, d_model_p, jnp.float32)
    gamma = pad2(params["ln_gamma"], 1, d_model_p, jnp.float32)  # zero pad -> padded LN cols vanish
    beta = pad2(params["ln_beta"], 1, d_model_p, jnp.float32)
    w1 = pad2(params["w1"], d_model_p, d_ff_p, jnp.bfloat16)
    b1 = pad2(params["b1"], 1, d_ff_p, jnp.float32)
    w2 = pad2(params["w2"], d_ff_p, d_model_p, jnp.bfloat16)
    b2 = pad2(params["b2"], 1, d_model_p, jnp.float32)
    w_dec = pad2(params["w_dec"], d_model_p, d_out_p, jnp.bfloat16)
    b_dec = pad2(params["b_dec"], 1, d_out_p, jnp.float32)

    # Explicit VMEM budget: single-buffered bf16 weights + double-buffered row tiles
    # + f32 intermediates, with headroom.  Re-derive row_tile for v7x (64 MiB VMEM)
    # if this grows; add a d_ff reduction grid axis for very large d_ff.
    weight_bytes = 2 * (d_in_p * d_model_p + d_model_p * d_ff_p
                        + d_ff_p * d_model_p + d_model_p * d_out_p)
    bias_bytes = 4 * (4 * d_model_p + d_ff_p + d_out_p)
    io_bytes = 2 * (tr * d_in_p * 2) + 2 * (tr * d_out_p * 4)
    inter_bytes = 4 * tr * (3 * d_model_p + d_ff_p + d_out_p)
    est = weight_bytes + bias_bytes + io_bytes + 2 * inter_bytes
    vmem_limit = int(min(100 * 2**20, max(32 * 2**20, 2 * est)))

    kernel = functools.partial(_seq_module_kernel, d_model=d_model)

    out_p = pl.pallas_call(
        kernel,
        out_shape=jax.ShapeDtypeStruct((rows_p, d_out_p), jnp.float32),
        grid_spec=pltpu.PrefetchScalarGridSpec(
            num_scalar_prefetch=0,
            grid=(rows_p // tr,),
            in_specs=[
                pl.BlockSpec((tr, d_in_p), lambda i: (i, 0)),   # streamed rows
                _resident_spec((d_in_p, d_model_p)),
                _resident_spec((1, d_model_p)),
                _resident_spec((1, d_model_p)),
                _resident_spec((1, d_model_p)),
                _resident_spec((d_model_p, d_ff_p)),
                _resident_spec((1, d_ff_p)),
                _resident_spec((d_ff_p, d_model_p)),
                _resident_spec((1, d_model_p)),
                _resident_spec((d_model_p, d_out_p)),
                _resident_spec((1, d_out_p)),
            ],
            out_specs=pl.BlockSpec((tr, d_out_p), lambda i: (i, 0)),
        ),
        compiler_params=pltpu.CompilerParams(
            dimension_semantics=("parallel",),  # row axis shards across v7x's 2 TCs
            vmem_limit_bytes=vmem_limit,
        ),
    )(x2d, w_enc, b_enc, gamma, beta, w1, b1, w2, b2, w_dec, b_dec)

    return out_p[:rows, :d_out].reshape(B, L, d_out)


def _reference_forward(x, params, matmul_dtype=jnp.float32):
    """Pure-JAX reference of the same encoder->model->decoder pipeline."""
    md = matmul_dtype
    dot = lambda a, b: jnp.dot(a.astype(md), b.astype(md),
                               preferred_element_type=jnp.float32)
    h = dot(x, params["w_enc"]) + params["b_enc"]
    mean = jnp.mean(h, axis=-1, keepdims=True)
    var = jnp.mean((h - mean) ** 2, axis=-1, keepdims=True)
    ln = (h - mean) * jax.lax.rsqrt(var + 1e-5) * params["ln_gamma"] + params["ln_beta"]
    u = jax.nn.gelu(dot(ln, params["w1"]) + params["b1"], approximate=True)
    m = h + dot(u, params["w2"]) + params["b2"]
    return dot(m, params["w_dec"]) + params["b_dec"]


def init_params(key, d_input, d_model, d_ff, d_output):
    ks = jax.random.split(key, 4)
    scale = lambda fan_in: 1.0 / jnp.sqrt(jnp.float32(fan_in))
    return {
        "w_enc": jax.random.normal(ks[0], (d_input, d_model), jnp.float32) * scale(d_input),
        "b_enc": jnp.zeros((1, d_model), jnp.float32),
        "ln_gamma": jnp.ones((1, d_model), jnp.float32),
        "ln_beta": jnp.zeros((1, d_model), jnp.float32),
        "w1": jax.random.normal(ks[1], (d_model, d_ff), jnp.float32) * scale(d_model),
        "b1": jnp.zeros((1, d_ff), jnp.float32),
        "w2": jax.random.normal(ks[2], (d_ff, d_model), jnp.float32) * scale(d_ff),
        "b2": jnp.zeros((1, d_model), jnp.float32),
        "w_dec": jax.random.normal(ks[3], (d_model, d_output), jnp.float32) * scale(d_model),
        "b_dec": jnp.zeros((1, d_output), jnp.float32),
    }


if __name__ == "__main__":
    # Small shapes consistent with a generic sequence model forward.
    B, L, d_input, d_model, d_ff, d_output = 2, 8, 16, 32, 64, 16

    key = jax.random.PRNGKey(0)
    k_x, k_p = jax.random.split(key)
    x = jax.random.normal(k_x, (B, L, d_input), jnp.float32)
    params = init_params(k_p, d_input, d_model, d_ff, d_output)

    out = sequence_module_forward(x, params, row_tile=256)
    out = jax.block_until_ready(out)
    assert out.shape == (B, L, d_output)

    # Tight parity check against a reference using the same bf16-operand / f32-acc math.
    ref_bf16 = _reference_forward(x, params, matmul_dtype=jnp.bfloat16)
    assert jnp.allclose(out, ref_bf16, atol=2e-3, rtol=2e-3), \
        float(jnp.max(jnp.abs(out - ref_bf16)))

    # Loose sanity bound against full-f32 math (bf16 MXU operands introduce ~1% error).
    ref_f32 = _reference_forward(x, params, matmul_dtype=jnp.float32)
    rel = jnp.linalg.norm(out - ref_f32) / jnp.linalg.norm(ref_f32)
    assert rel < 5e-2, float(rel)

    # TODO(synk): state handling (model.step / _process_state) and loss/metrics are
    # training-loop plumbing with no kernel-level compute; omitted.
    print("KERNEL_OK")
</pallas_src>

<mosaic_0001>
module attributes {stable_mosaic.version = 11 : i64} {
  func.func @_seq_module_kernel(%arg0: i32, %arg1: memref<16x128xbf16, #tpu.memory_space<vmem>>, %arg2: memref<128x128xbf16, #tpu.memory_space<vmem>>, %arg3: memref<1x128xf32, #tpu.memory_space<vmem>>, %arg4: memref<1x128xf32, #tpu.memory_space<vmem>>, %arg5: memref<1x128xf32, #tpu.memory_space<vmem>>, %arg6: memref<128x128xbf16, #tpu.memory_space<vmem>>, %arg7: memref<1x128xf32, #tpu.memory_space<vmem>>, %arg8: memref<128x128xbf16, #tpu.memory_space<vmem>>, %arg9: memref<1x128xf32, #tpu.memory_space<vmem>>, %arg10: memref<128x128xbf16, #tpu.memory_space<vmem>>, %arg11: memref<1x128xf32, #tpu.memory_space<vmem>>, %arg12: memref<16x128xf32, #tpu.memory_space<vmem>>) attributes {dimension_semantics = [#tpu.dimension_semantics<parallel>], iteration_bounds = array<i64: 1>, scalar_prefetch = 0 : i64, scratch_operands = 0 : i64, tpu.core_type = #tpu.core_type<tc>, window_params = [{transform_indices = @transform_0, window_bounds = array<i64: 16, 128>}, {pipeline_mode = #tpu.pipeline_mode<synchronous>, transform_indices = @transform_1, window_bounds = array<i64: 128, 128>}, {pipeline_mode = #tpu.pipeline_mode<synchronous>, transform_indices = @transform_2, window_bounds = array<i64: 1, 128>}, {pipeline_mode = #tpu.pipeline_mode<synchronous>, transform_indices = @transform_3, window_bounds = array<i64: 1, 128>}, {pipeline_mode = #tpu.pipeline_mode<synchronous>, transform_indices = @transform_4, window_bounds = array<i64: 1, 128>}, {pipeline_mode = #tpu.pipeline_mode<synchronous>, transform_indices = @transform_5, window_bounds = array<i64: 128, 128>}, {pipeline_mode = #tpu.pipeline_mode<synchronous>, transform_indices = @transform_6, window_bounds = array<i64: 1, 128>}, {pipeline_mode = #tpu.pipeline_mode<synchronous>, transform_indices = @transform_7, window_bounds = array<i64: 128, 128>}, {pipeline_mode = #tpu.pipeline_mode<synchronous>, transform_indices = @transform_8, window_bounds = array<i64: 1, 128>}, {pipeline_mode = #tpu.pipeline_mode<synchronous>, transform_indices = @transform_9, window_bounds = array<i64: 128, 128>}, {pipeline_mode = #tpu.pipeline_mode<synchronous>, transform_indices = @transform_10, window_bounds = array<i64: 1, 128>}, {transform_indices = @transform_11, window_bounds = array<i64: 16, 128>}]} {
    %c0 = arith.constant 0 : index
    %c0_0 = arith.constant 0 : index
    %0 = vector.load %arg3[%c0, %c0_0] : memref<1x128xf32, #tpu.memory_space<vmem>>, vector<1x128xf32>
    %c0_1 = arith.constant 0 : index
    %c0_2 = arith.constant 0 : index
    %1 = vector.load %arg4[%c0_1, %c0_2] : memref<1x128xf32, #tpu.memory_space<vmem>>, vector<1x128xf32>
    %c0_3 = arith.constant 0 : index
    %c0_4 = arith.constant 0 : index
    %2 = vector.load %arg5[%c0_3, %c0_4] : memref<1x128xf32, #tpu.memory_space<vmem>>, vector<1x128xf32>
    %c0_5 = arith.constant 0 : index
    %c0_6 = arith.constant 0 : index
    %3 = vector.load %arg7[%c0_5, %c0_6] : memref<1x128xf32, #tpu.memory_space<vmem>>, vector<1x128xf32>
    %c0_7 = arith.constant 0 : index
    %c0_8 = arith.constant 0 : index
    %4 = vector.load %arg9[%c0_7, %c0_8] : memref<1x128xf32, #tpu.memory_space<vmem>>, vector<1x128xf32>
    %c0_9 = arith.constant 0 : index
    %c0_10 = arith.constant 0 : index
    %5 = vector.load %arg11[%c0_9, %c0_10] : memref<1x128xf32, #tpu.memory_space<vmem>>, vector<1x128xf32>
    %c0_11 = arith.constant 0 : index
    %c0_12 = arith.constant 0 : index
    %6 = vector.load %arg1[%c0_11, %c0_12] : memref<16x128xbf16, #tpu.memory_space<vmem>>, vector<16x128xbf16>
    %c0_13 = arith.constant 0 : index
    %c0_14 = arith.constant 0 : index
    %7 = vector.load %arg2[%c0_13, %c0_14] : memref<128x128xbf16, #tpu.memory_space<vmem>>, vector<128x128xbf16>
    %cst = arith.constant dense<0.000000e+00> : vector<16x128xf32>
    %8 = tpu.matmul %6, %7, %cst {dimension_numbers = #tpu.dot_dimension_numbers<[1], [0], [0], [1], [0, 0, 1, 1], [], []>} : vector<16x128xbf16>, vector<128x128xbf16>, vector<16x128xf32> -> vector<16x128xf32>
    %9 = vector.broadcast %0 : vector<1x128xf32> to vector<16x128xf32>
    %10 = arith.addf %8, %9 : vector<16x128xf32>
    %cst_15 = arith.constant dense<0.000000e+00> : vector<16xf32>
    %11 = vector.multi_reduction <add>, %10, %cst_15 [1] : vector<16x128xf32> to vector<16xf32>
    %12 = vector.shape_cast %11 : vector<16xf32> to vector<16x1xf32>
    %cst_16 = arith.constant 3.125000e-02 : f32
    %13 = vector.broadcast %cst_16 : f32 to vector<16x1xf32>
    %14 = arith.mulf %12, %13 : vector<16x1xf32>
    %15 = tpu.iota {dimensions = array<i32: 1>} : vector<1x128xi32>
    %c32_i32 = arith.constant 32 : i32
    %16 = vector.broadcast %c32_i32 : i32 to vector<1x128xi32>
    %17 = arith.cmpi slt, %15, %16 : vector<1x128xi32>
    %18 = vector.broadcast %14 : vector<16x1xf32> to vector<16x128xf32>
    %19 = arith.subf %10, %18 : vector<16x128xf32>
    %cst_17 = arith.constant 0.000000e+00 : f32
    %20 = vector.shape_cast %17 : vector<1x128xi1> to vector<1x128xi1>
    %21 = vector.broadcast %20 : vector<1x128xi1> to vector<16x128xi1>
    %22 = vector.broadcast %cst_17 : f32 to vector<16x128xf32>
    %23 = arith.select %21, %19, %22 : vector<16x128xi1>, vector<16x128xf32>
    %24 = arith.mulf %23, %23 : vector<16x128xf32>
    %cst_18 = arith.constant dense<0.000000e+00> : vector<16xf32>
    %25 = vector.multi_reduction <add>, %24, %cst_18 [1] : vector<16x128xf32> to vector<16xf32>
    %26 = vector.shape_cast %25 : vector<16xf32> to vector<16x1xf32>
    %cst_19 = arith.constant 3.125000e-02 : f32
    %27 = vector.broadcast %cst_19 : f32 to vector<16x1xf32>
    %28 = arith.mulf %26, %27 : vector<16x1xf32>
    %cst_20 = arith.constant 9.99999974E-6 : f32
    %29 = vector.broadcast %cst_20 : f32 to vector<16x1xf32>
    %30 = arith.addf %28, %29 : vector<16x1xf32>
    %31 = math.rsqrt %30 : vector<16x1xf32>
    %32 = vector.broadcast %31 : vector<16x1xf32> to vector<16x128xf32>
    %33 = arith.mulf %23, %32 : vector<16x128xf32>
    %34 = vector.broadcast %1 : vector<1x128xf32> to vector<16x128xf32>
    %35 = arith.mulf %33, %34 : vector<16x128xf32>
    %36 = vector.broadcast %2 : vector<1x128xf32> to vector<16x128xf32>
    %37 = arith.addf %35, %36 : vector<16x128xf32>
    %38 = arith.truncf %37 : vector<16x128xf32> to vector<16x128xbf16>
    %c0_21 = arith.constant 0 : index
    %c0_22 = arith.constant 0 : index
    %39 = vector.load %arg6[%c0_21, %c0_22] : memref<128x128xbf16, #tpu.memory_space<vmem>>, vector<128x128xbf16>
    %cst_23 = arith.constant dense<0.000000e+00> : vector<16x128xf32>
    %40 = tpu.matmul %38, %39, %cst_23 {dimension_numbers = #tpu.dot_dimension_numbers<[1], [0], [0], [1], [0, 0, 1, 1], [], []>} : vector<16x128xbf16>, vector<128x128xbf16>, vector<16x128xf32> -> vector<16x128xf32>
    %41 = vector.broadcast %3 : vector<1x128xf32> to vector<16x128xf32>
    %42 = arith.addf %40, %41 : vector<16x128xf32>
    %43 = arith.mulf %42, %42 : vector<16x128xf32>
    %44 = arith.mulf %42, %43 : vector<16x128xf32>
    %cst_24 = arith.constant 4.471500e-02 : f32
    %45 = vector.broadcast %cst_24 : f32 to vector<16x128xf32>
    %46 = arith.mulf %45, %44 : vector<16x128xf32>
    %47 = arith.addf %42, %46 : vector<16x128xf32>
    %cst_25 = arith.constant 0.797884583 : f32
    %48 = vector.broadcast %cst_25 : f32 to vector<16x128xf32>
    %49 = arith.mulf %48, %47 : vector<16x128xf32>
    %50 = math.tanh %49 : vector<16x128xf32>
    %cst_26 = arith.constant 1.000000e+00 : f32
    %51 = vector.broadcast %cst_26 : f32 to vector<16x128xf32>
    %52 = arith.addf %51, %50 : vector<16x128xf32>
    %cst_27 = arith.constant 5.000000e-01 : f32
    %53 = vector.broadcast %cst_27 : f32 to vector<16x128xf32>
    %54 = arith.mulf %53, %52 : vector<16x128xf32>
    %55 = arith.mulf %42, %54 : vector<16x128xf32>
    %56 = arith.truncf %55 : vector<16x128xf32> to vector<16x128xbf16>
    %c0_28 = arith.constant 0 : index
    %c0_29 = arith.constant 0 : index
    %57 = vector.load %arg8[%c0_28, %c0_29] : memref<128x128xbf16, #tpu.memory_space<vmem>>, vector<128x128xbf16>
    %cst_30 = arith.constant dense<0.000000e+00> : vector<16x128xf32>
    %58 = tpu.matmul %56, %57, %cst_30 {dimension_numbers = #tpu.dot_dimension_numbers<[1], [0], [0], [1], [0, 0, 1, 1], [], []>} : vector<16x128xbf16>, vector<128x128xbf16>, vector<16x128xf32> -> vector<16x128xf32>
    %59 = arith.addf %10, %58 : vector<16x128xf32>
    %60 = vector.broadcast %4 : vector<1x128xf32> to vector<16x128xf32>
    %61 = arith.addf %59, %60 : vector<16x128xf32>
    %62 = arith.truncf %61 : vector<16x128xf32> to vector<16x128xbf16>
    %c0_31 = arith.constant 0 : index
    %c0_32 = arith.constant 0 : index
    %63 = vector.load %arg10[%c0_31, %c0_32] : memref<128x128xbf16, #tpu.memory_space<vmem>>, vector<128x128xbf16>
    %cst_33 = arith.constant dense<0.000000e+00> : vector<16x128xf32>
    %64 = tpu.matmul %62, %63, %cst_33 {dimension_numbers = #tpu.dot_dimension_numbers<[1], [0], [0], [1], [0, 0, 1, 1], [], []>} : vector<16x128xbf16>, vector<128x128xbf16>, vector<16x128xf32> -> vector<16x128xf32>
    %65 = vector.broadcast %5 : vector<1x128xf32> to vector<16x128xf32>
    %66 = arith.addf %64, %65 : vector<16x128xf32>
    %c0_34 = arith.constant 0 : index
    %c0_35 = arith.constant 0 : index
    %67 = vector.load %arg12[%c0_34, %c0_35] : memref<16x128xf32, #tpu.memory_space<vmem>>, vector<16x128xf32>
    tpu.vector_store %arg12[%c0_34, %c0_35], %66 {strides = array<i32>} : memref<16x128xf32, #tpu.memory_space<vmem>>, vector<16x128xf32>,
    return
  }
  func.func @transform_0(%arg0: i32) -> (i32, i32) {
    %c0_i32 = arith.constant 0 : i32
    %c0_i32_0 = arith.constant 0 : i32
    return %arg0, %c0_i32 : i32, i32
  }
  func.func @transform_1(%arg0: i32) -> (i32, i32) {
    %c0_i32 = arith.constant 0 : i32
    %c0_i32_0 = arith.constant 0 : i32
    %c0_i32_1 = arith.constant 0 : i32
    return %c0_i32, %c0_i32_0 : i32, i32
  }
  func.func @transform_2(%arg0: i32) -> (i32, i32) {
    %c0_i32 = arith.constant 0 : i32
    %c0_i32_0 = arith.constant 0 : i32
    %c0_i32_1 = arith.constant 0 : i32
    return %c0_i32, %c0_i32_0 : i32, i32
  }
  func.func @transform_3(%arg0: i32) -> (i32, i32) {
    %c0_i32 = arith.constant 0 : i32
    %c0_i32_0 = arith.constant 0 : i32
    %c0_i32_1 = arith.constant 0 : i32
    return %c0_i32, %c0_i32_0 : i32, i32
  }
  func.func @transform_4(%arg0: i32) -> (i32, i32) {
    %c0_i32 = arith.constant 0 : i32
    %c0_i32_0 = arith.constant 0 : i32
    %c0_i32_1 = arith.constant 0 : i32
    return %c0_i32, %c0_i32_0 : i32, i32
  }
  func.func @transform_5(%arg0: i32) -> (i32, i32) {
    %c0_i32 = arith.constant 0 : i32
    %c0_i32_0 = arith.constant 0 : i32
    %c0_i32_1 = arith.constant 0 : i32
    return %c0_i32, %c0_i32_0 : i32, i32
  }
  func.func @transform_6(%arg0: i32) -> (i32, i32) {
    %c0_i32 = arith.constant 0 : i32
    %c0_i32_0 = arith.constant 0 : i32
    %c0_i32_1 = arith.constant 0 : i32
    return %c0_i32, %c0_i32_0 : i32, i32
  }
  func.func @transform_7(%arg0: i32) -> (i32, i32) {
    %c0_i32 = arith.constant 0 : i32
    %c0_i32_0 = arith.constant 0 : i32
    %c0_i32_1 = arith.constant 0 : i32
    return %c0_i32, %c0_i32_0 : i32, i32
  }
  func.func @transform_8(%arg0: i32) -> (i32, i32) {
    %c0_i32 = arith.constant 0 : i32
    %c0_i32_0 = arith.constant 0 : i32
    %c0_i32_1 = arith.constant 0 : i32
    return %c0_i32, %c0_i32_0 : i32, i32
  }
  func.func @transform_9(%arg0: i32) -> (i32, i32) {
    %c0_i32 = arith.constant 0 : i32
    %c0_i32_0 = arith.constant 0 : i32
    %c0_i32_1 = arith.constant 0 : i32
    return %c0_i32, %c0_i32_0 : i32, i32
  }
  func.func @transform_10(%arg0: i32) -> (i32, i32) {
    %c0_i32 = arith.constant 0 : i32
    %c0_i32_0 = arith.constant 0 : i32
    %c0_i32_1 = arith.constant 0 : i32
    return %c0_i32, %c0_i32_0 : i32, i32
  }
  func.func @transform_11(%arg0: i32) -> (i32, i32) {
    %c0_i32 = arith.constant 0 : i32
    %c0_i32_0 = arith.constant 0 : i32
    return %arg0, %c0_i32 : i32, i32
  }
}

</mosaic_0001>

<llo_original>
// kernel: sequence_module_forward.1
$region0: #{sequence_module_forward.1}
  #allocation0 [shape = 'u32[]', space=smem, size = 0x4, offset = 0x4, fixed_abs, tag = 'smem constant byte address 0x4 - core index']
  #allocation1 [shape = 'u32[144,128]{1,0:T(1,128)}', space=vmem, size = 0x12000, scoped, tag = 'internal scratch']
  %s0 = inlined_call_operand.vmem [shape: bf16[16,128], index: 0, kind: input, shape index: {}]
  %s1 = inlined_call_operand.vmem [shape: bf16[128,128], index: 1, kind: input, shape index: {}]
  %s2 = inlined_call_operand.vmem [shape: f32[1,128], index: 2, kind: input, shape index: {}]
  %s3 = inlined_call_operand.vmem [shape: f32[1,128], index: 3, kind: input, shape index: {}]
  %s4 = inlined_call_operand.vmem [shape: f32[1,128], index: 4, kind: input, shape index: {}]
  %s5 = inlined_call_operand.vmem [shape: bf16[128,128], index: 5, kind: input, shape index: {}]
  %s6 = inlined_call_operand.vmem [shape: f32[1,128], index: 6, kind: input, shape index: {}]
  %s7 = inlined_call_operand.vmem [shape: bf16[128,128], index: 7, kind: input, shape index: {}]
  %s8 = inlined_call_operand.vmem [shape: f32[1,128], index: 8, kind: input, shape index: {}]
  %s9 = inlined_call_operand.vmem [shape: bf16[128,128], index: 9, kind: input, shape index: {}]
  %s10 = inlined_call_operand.vmem [shape: f32[1,128], index: 10, kind: input, shape index: {}]
  %s11 = inlined_call_operand.vmem [shape: f32[16,128], index: 11, kind: output, shape index: {}]
  %s12 = sld [smem:[#allocation0]]
  $region54: #{sequence_module_forward.1} parent=0
    _
  %s14 = ssub.s32 1, %s12
  %s15 = scalar_select 0, %s14, %s12
  // Predicated region
  $region2: #{sequence_module_forward.1} parent=0 // pred_check
    _
  $region3: #{sequence_module_forward.1} parent=0 // pred_check_branch
    %17 = sbr.rel (0) target = $region5
  $region4: #{sequence_module_forward.1} parent=0 // pred_region
    _
  $region5: #{sequence_module_forward.1} parent=0 // pred_fallthru
    _
  // Predicated region
  $region6: #{sequence_module_forward.1} parent=0 // pred_check
    _
  $region7: #{sequence_module_forward.1} parent=0 // pred_check_branch
    %19 = sbr.rel (0) target = $region9
  $region8: #{sequence_module_forward.1} parent=0 // pred_region
    _
  $region9: #{sequence_module_forward.1} parent=0 // pred_fallthru
    _
  // Predicated region
  $region10: #{sequence_module_forward.1} parent=0 // pred_check
    _
  $region11: #{sequence_module_forward.1} parent=0 // pred_check_branch
    %21 = sbr.rel (0) target = $region13
  $region12: #{sequence_module_forward.1} parent=0 // pred_region
    _
  $region13: #{sequence_module_forward.1} parent=0 // pred_fallthru
    _
  // Predicated region
  $region14: #{sequence_module_forward.1} parent=0 // pred_check
    _
  $region15: #{sequence_module_forward.1} parent=0 // pred_check_branch
    %23 = sbr.rel (0) target = $region17
  $region16: #{sequence_module_forward.1} parent=0 // pred_region
    _
  $region17: #{sequence_module_forward.1} parent=0 // pred_fallthru
    _
  // Predicated region
  $region18: #{sequence_module_forward.1} parent=0 // pred_check
    _
  $region19: #{sequence_module_forward.1} parent=0 // pred_check_branch
    %25 = sbr.rel (0) target = $region21
  $region20: #{sequence_module_forward.1} parent=0 // pred_region
    _
  $region21: #{sequence_module_forward.1} parent=0 // pred_fallthru
    _
  // Predicated region
  $region22: #{sequence_module_forward.1} parent=0 // pred_check
    _
  $region23: #{sequence_module_forward.1} parent=0 // pred_check_branch
    %27 = sbr.rel (0) target = $region25
  $region24: #{sequence_module_forward.1} parent=0 // pred_region
    _
  $region25: #{sequence_module_forward.1} parent=0 // pred_fallthru
    _
  // Predicated region
  $region26: #{sequence_module_forward.1} parent=0 // pred_check
    _
  $region27: #{sequence_module_forward.1} parent=0 // pred_check_branch
    %29 = sbr.rel (0) target = $region29
  $region28: #{sequence_module_forward.1} parent=0 // pred_region
    _
  $region29: #{sequence_module_forward.1} parent=0 // pred_fallthru
    _
  // Predicated region
  $region30: #{sequence_module_forward.1} parent=0 // pred_check
    _
  $region31: #{sequence_module_forward.1} parent=0 // pred_check_branch
    %31 = sbr.rel (0) target = $region33
  $region32: #{sequence_module_forward.1} parent=0 // pred_region
    _
  $region33: #{sequence_module_forward.1} parent=0 // pred_fallthru
    _
  // Predicated region
  $region34: #{sequence_module_forward.1} parent=0 // pred_check
    _
  $region35: #{sequence_module_forward.1} parent=0 // pred_check_branch
    %33 = sbr.rel (0) target = $region37
  $region36: #{sequence_module_forward.1} parent=0 // pred_region
    _
  $region37: #{sequence_module_forward.1} parent=0 // pred_fallthru
    _
  // Predicated region
  $region38: #{sequence_module_forward.1} parent=0 // pred_check
    _
  $region39: #{sequence_module_forward.1} parent=0 // pred_check_branch
    %35 = sbr.rel (0) target = $region41
  $region40: #{sequence_module_forward.1} parent=0 // pred_region
    _
  $region41: #{sequence_module_forward.1} parent=0 // pred_fallthru
    _
  // Predicated region
  $region42: #{sequence_module_forward.1} parent=0 // pred_check
    _
  $region43: #{sequence_module_forward.1} parent=0 // pred_check_branch
    %37 = sbr.rel (0) target = $region45
  $region44: #{sequence_module_forward.1} parent=0 // pred_region
    _
  $region45: #{sequence_module_forward.1} parent=0 // pred_fallthru
    _
  %v39 = vld [vmem:[%s2] sm:$0x1]
  %v40 = vld [vmem:[%s3] sm:$0x1]
  %v41 = vld [vmem:[%s4] sm:$0x1]
  %v42 = vld [vmem:[%s6] sm:$0x1]
  %v43 = vld [vmem:[%s8] sm:$0x1]
  %v44 = vld [vmem:[%s10] sm:$0x1]
  %v45 = vld [vmem:[%s0] sm:$0xf]
  %v46 = vld [vmem:[%s0 + $0x4] sm:$0xf]
  %v47 = vld [vmem:[%s1] sm:$0xf]
  %v48 = vld [vmem:[%s1 + $0x4] sm:$0xf]
  %v49 = vld [vmem:[%s1 + $0x8] sm:$0xf]
  %v50 = vld [vmem:[%s1 + $0xc] sm:$0xf]
  %v51 = vld [vmem:[%s1 + $0x10] sm:$0xf]
  %v52 = vld [vmem:[%s1 + $0x14] sm:$0xf]
  %v53 = vld [vmem:[%s1 + $0x18] sm:$0xf]
  %v54 = vld [vmem:[%s1 + $0x1c] sm:$0xf]
  %v55 = vld [vmem:[%s1 + $0x20] sm:$0xf]
  %v56 = vld [vmem:[%s1 + $0x24] sm:$0xf]
  %v57 = vld [vmem:[%s1 + $0x28] sm:$0xf]
  %v58 = vld [vmem:[%s1 + $0x2c] sm:$0xf]
  %v59 = vld [vmem:[%s1 + $0x30] sm:$0xf]
  %v60 = vld [vmem:[%s1 + $0x34] sm:$0xf]
  %v61 = vld [vmem:[%s1 + $0x38] sm:$0xf]
  %v62 = vld [vmem:[%s1 + $0x3c] sm:$0xf]
  %v64 = vlaneseq
  %v65 = vshrl.u32 %v64, 7
  %v66 = vsub.s32 0, %v65
  %v67 = vrot.slane %v39, %v66
  %v71 = vunpack.c.l.b16 %v45
  %v72 = vunpack.c.l.b16 %v46
  %v73 = vpack.c.b16 %v72, %v71
  %v91 = vunpack.c.l.b16 %v47
  %v92 = vunpack.c.l.b16 %v48
  %v93 = vunpack.c.l.b16 %v49
  %v94 = vunpack.c.l.b16 %v50
  %v95 = vunpack.c.l.b16 %v51
  %v96 = vunpack.c.l.b16 %v52
  %v97 = vunpack.c.l.b16 %v53
  %v98 = vunpack.c.l.b16 %v54
  %v99 = vunpack.c.l.b16 %v55
  %v100 = vunpack.c.l.b16 %v56
  %v101 = vunpack.c.l.b16 %v57
  %v102 = vunpack.c.l.b16 %v58
  %v103 = vunpack.c.l.b16 %v59
  %v104 = vunpack.c.l.b16 %v60
  %v105 = vunpack.c.l.b16 %v61
  %v106 = vunpack.c.l.b16 %v62
  %v107 = vpack.c.b16 %v92, %v91
  %v108 = vpack.c.b16 %v94, %v93
  %v109 = vpack.c.b16 %v96, %v95
  %v110 = vpack.c.b16 %v98, %v97
  %v111 = vpack.c.b16 %v100, %v99
  %v112 = vpack.c.b16 %v102, %v101
  %v113 = vpack.c.b16 %v104, %v103
  %v114 = vpack.c.b16 %v106, %v105
  %123 = vmatprep.subr.bf16.mxu0 0
  %124 = vmatpush1.bf16.msra.mxu0 %v114
  %125 = vmatprep.subr.bf16.mxu0 0
  %126 = vmatpush1.bf16.msra.mxu0 %v113
  %127 = vmatprep.subr.bf16.mxu0 0
  %128 = vmatpush1.bf16.msra.mxu0 %v112
  %129 = vmatprep.subr.bf16.mxu0 0
  %130 = vmatpush1.bf16.msra.mxu0 %v111
  %131 = vmatprep.subr.bf16.mxu0 0
  %132 = vmatpush1.bf16.msra.mxu0 %v110
  %133 = vmatprep.subr.bf16.mxu0 0
  %134 = vmatpush1.bf16.msra.mxu0 %v109
  %135 = vmatprep.subr.bf16.mxu0 0
  %136 = vmatpush1.bf16.msra.mxu0 %v108
  %137 = vmatprep.subr.bf16.mxu0 0
  %138 = vmatpush1.bf16.msra.mxu0 %v107
  %139 = vmatprep.subr.bf16.mxu0 0
  %140 = vmatpush2.bf16.msra.mxu0 0
  %141 = vmatprep.subr.bf16.mxu0 0
  %142 = vmatpush2.bf16.msra.mxu0 0
  %143 = vmatprep.subr.bf16.mxu0 0
  %144 = vmatpush2.bf16.msra.mxu0 0
  %145 = vmatprep.subr.bf16.mxu0 0
  %146 = vmatpush2.bf16.msra.mxu0 0
  %147 = vmatprep.subr.bf16.mxu0 0
  %148 = vmatpush2.bf16.msra.mxu0 0
  %149 = vmatprep.subr.bf16.mxu0 0
  %150 = vmatpush2.bf16.msra.mxu0 0
  %151 = vmatprep.subr.bf16.mxu0 0
  %152 = vmatpush2.bf16.msra.mxu0 0
  %153 = vmatprep.subr.bf16.mxu0 0
  %154 = vmatpush2.bf16.msra.mxu0 0
  %155 = vmatprep.mubr.bf16.mxu0 0
  %156 = vmatmul.mubr.bf16.gmra.mxu0 %v73
  %v157 = vpop.f32.mrf.mxu0
  %v158 = vadd.f32 %v67, %v157
  %v159 = vpop.f32.mrf.mxu0
  %v160 = vpop.f32.mrf.mxu0
  %v161 = vadd.f32 %v67, %v160
  %v162 = vpop.f32.mrf.mxu0
  %163 = vdwg.mxu0
  %164 = vadd.xlane.f32.xlu0 %v158
  %v165 = vpop.xlane.xlu0 %164
  %166 = vadd.xlane.f32.xlu0 %v161
  %v167 = vpop.xlane.xlu0 %166
  %v168 = vmul.f32 %v165, 0.03125
  %v169 = vmul.f32 %v167, 0.03125
  %v170 = vlaneseq
  %v171 = vand.u32 %v170, 127
  %vm172 = vcmp.lt.s32.totalorder %v171, 32
  %v173 = vsub.f32 %v158, %v168
  %v174 = vsub.f32 %v161, %v169
  %v175 = vsel %vm172, 1, 0
  %vm176 = vcmp.eq.s32.totalorder %v175, 1
  %v177 = vsel %vm176, %v173, 0.0
  %v178 = vsel %vm176, %v174, 0.0
  %v179 = vmul.f32 %v177, %v177
  %v180 = vmul.f32 %v178, %v178
  %181 = vadd.xlane.f32.xlu0 %v179
  %v182 = vpop.xlane.xlu0 %181
  %183 = vadd.xlane.f32.xlu0 %v180
  %v184 = vpop.xlane.xlu0 %183
  %v185 = vmul.f32 %v182, 0.03125
  %v186 = vmul.f32 %v184, 0.03125
  %v187 = vadd.f32 %v185, 1e-05
  %v188 = vadd.f32 %v186, 1e-05
  %v189 = vrsqrt.pop %v187
  %v190 = vrsqrt.pop %v188
  %v191 = vmul.f32 %v177, %v189
  %v192 = vmul.f32 %v178, %v190
  %v194 = vlaneseq
  %v195 = vshrl.u32 %v194, 7
  %v196 = vsub.s32 0, %v195
  %v197 = vrot.slane %v40, %v196
  %v199 = vmul.f32 %v191, %v197
  %v200 = vmul.f32 %v192, %v197
  %v202 = vlaneseq
  %v203 = vshrl.u32 %v202, 7
  %v204 = vsub.s32 0, %v203
  %v205 = vrot.slane %v41, %v204
  %v207 = vadd.f32 %v199, %v205
  %v208 = vadd.f32 %v200, %v205
  %v209 = vpack.c.bf16 %v208, %v207
  %v210 = vld [vmem:[%s5] sm:$0xf]
  %v211 = vld [vmem:[%s5 + $0x4] sm:$0xf]
  %v212 = vld [vmem:[%s5 + $0x8] sm:$0xf]
  %v213 = vld [vmem:[%s5 + $0xc] sm:$0xf]
  %v214 = vld [vmem:[%s5 + $0x10] sm:$0xf]
  %v215 = vld [vmem:[%s5 + $0x14] sm:$0xf]
  %v216 = vld [vmem:[%s5 + $0x18] sm:$0xf]
  %v217 = vld [vmem:[%s5 + $0x1c] sm:$0xf]
  %v218 = vld [vmem:[%s5 + $0x20] sm:$0xf]
  %v219 = vld [vmem:[%s5 + $0x24] sm:$0xf]
  %v220 = vld [vmem:[%s5 + $0x28] sm:$0xf]
  %v221 = vld [vmem:[%s5 + $0x2c] sm:$0xf]
  %v222 = vld [vmem:[%s5 + $0x30] sm:$0xf]
  %v223 = vld [vmem:[%s5 + $0x34] sm:$0xf]
  %v224 = vld [vmem:[%s5 + $0x38] sm:$0xf]
  %v225 = vld [vmem:[%s5 + $0x3c] sm:$0xf]
  %v227 = vlaneseq
  %v228 = vshrl.u32 %v227, 7
  %v229 = vsub.s32 0, %v228
  %v230 = vrot.slane %v42, %v229
  %v248 = vunpack.c.l.b16 %v210
  %v249 = vunpack.c.l.b16 %v211
  %v250 = vunpack.c.l.b16 %v212
  %v251 = vunpack.c.l.b16 %v213
  %v252 = vunpack.c.l.b16 %v214
  %v253 = vunpack.c.l.b16 %v215
  %v254 = vunpack.c.l.b16 %v216
  %v255 = vunpack.c.l.b16 %v217
  %v256 = vunpack.c.l.b16 %v218
  %v257 = vunpack.c.l.b16 %v219
  %v258 = vunpack.c.l.b16 %v220
  %v259 = vunpack.c.l.b16 %v221
  %v260 = vunpack.c.l.b16 %v222
  %v261 = vunpack.c.l.b16 %v223
  %v262 = vunpack.c.l.b16 %v224
  %v263 = vunpack.c.l.b16 %v225
  %v264 = vpack.c.b16 %v249, %v248
  %v265 = vpack.c.b16 %v251, %v250
  %v266 = vpack.c.b16 %v253, %v252
  %v267 = vpack.c.b16 %v255, %v254
  %v268 = vpack.c.b16 %v257, %v256
  %v269 = vpack.c.b16 %v259, %v258
  %v270 = vpack.c.b16 %v261, %v260
  %v271 = vpack.c.b16 %v263, %v262
  %280 = vmatprep.subr.bf16.mxu0 0
  %281 = vmatpush1.bf16.msra.mxu0 %v271
  %282 = vmatprep.subr.bf16.mxu0 0
  %283 = vmatpush1.bf16.msra.mxu0 %v270
  %284 = vmatprep.subr.bf16.mxu0 0
  %285 = vmatpush1.bf16.msra.mxu0 %v269
  %286 = vmatprep.subr.bf16.mxu0 0
  %287 = vmatpush1.bf16.msra.mxu0 %v268
  %288 = vmatprep.subr.bf16.mxu0 0
  %289 = vmatpush1.bf16.msra.mxu0 %v267
  %290 = vmatprep.subr.bf16.mxu0 0
  %291 = vmatpush1.bf16.msra.mxu0 %v266
  %292 = vmatprep.subr.bf16.mxu0 0
  %293 = vmatpush1.bf16.msra.mxu0 %v265
  %294 = vmatprep.subr.bf16.mxu0 0
  %295 = vmatpush1.bf16.msra.mxu0 %v264
  %296 = vmatprep.subr.bf16.mxu0 0
  %297 = vmatpush2.bf16.msra.mxu0 0
  %298 = vmatprep.subr.bf16.mxu0 0
  %299 = vmatpush2.bf16.msra.mxu0 0
  %300 = vmatprep.subr.bf16.mxu0 0
  %301 = vmatpush2.bf16.msra.mxu0 0
  %302 = vmatprep.subr.bf16.mxu0 0
  %303 = vmatpush2.bf16.msra.mxu0 0
  %304 = vmatprep.subr.bf16.mxu0 0
  %305 = vmatpush2.bf16.msra.mxu0 0
  %306 = vmatprep.subr.bf16.mxu0 0
  %307 = vmatpush2.bf16.msra.mxu0 0
  %308 = vmatprep.subr.bf16.mxu0 0
  %309 = vmatpush2.bf16.msra.mxu0 0
  %310 = vmatprep.subr.bf16.mxu0 0
  %311 = vmatpush2.bf16.msra.mxu0 0
  %312 = vmatprep.mubr.bf16.mxu0 0
  %313 = vmatmul.mubr.bf16.gmra.mxu0 %v209
  %v314 = vpop.f32.mrf.mxu0
  %v315 = vadd.f32 %v230, %v314
  %v316 = vpop.f32.mrf.mxu0
  %v317 = vpop.f32.mrf.mxu0
  %v318 = vadd.f32 %v230, %v317
  %v319 = vpop.f32.mrf.mxu0
  %320 = vdwg.mxu0
  %v321 = vmul.f32 %v315, %v315
  %v322 = vmul.f32 %v318, %v318
  %v323 = vmul.f32 %v315, %v321
  %v324 = vmul.f32 %v318, %v322
  %v325 = vmul.f32 %v323, 0.044715
  %v326 = vmul.f32 %v324, 0.044715
  %v327 = vadd.f32 %v315, %v325
  %v328 = vadd.f32 %v318, %v326
  %v329 = vmul.f32 %v327, 0.7978846
  %v330 = vmul.f32 %v328, 0.7978846
  %v331 = vtanh.pop %v329
  %v332 = vtanh.pop %v330
  %v333 = vadd.f32 %v331, 1.0
  %v334 = vadd.f32 %v332, 1.0
  %v335 = vmul.f32 %v333, 0.5
  %v336 = vmul.f32 %v334, 0.5
  %v337 = vmul.f32 %v315, %v335
  %v338 = vmul.f32 %v318, %v336
  %v339 = vpack.c.bf16 %v338, %v337
  %v340 = vld [vmem:[%s7] sm:$0xf]
  %v341 = vld [vmem:[%s7 + $0x4] sm:$0xf]
  %v342 = vld [vmem:[%s7 + $0x8] sm:$0xf]
  %v343 = vld [vmem:[%s7 + $0xc] sm:$0xf]
  %v344 = vld [vmem:[%s7 + $0x10] sm:$0xf]
  %v345 = vld [vmem:[%s7 + $0x14] sm:$0xf]
  %v346 = vld [vmem:[%s7 + $0x18] sm:$0xf]
  %v347 = vld [vmem:[%s7 + $0x1c] sm:$0xf]
  %v348 = vld [vmem:[%s7 + $0x20] sm:$0xf]
  %v349 = vld [vmem:[%s7 + $0x24] sm:$0xf]
  %v350 = vld [vmem:[%s7 + $0x28] sm:$0xf]
  %v351 = vld [vmem:[%s7 + $0x2c] sm:$0xf]
  %v352 = vld [vmem:[%s7 + $0x30] sm:$0xf]
  %v353 = vld [vmem:[%s7 + $0x34] sm:$0xf]
  %v354 = vld [vmem:[%s7 + $0x38] sm:$0xf]
  %v355 = vld [vmem:[%s7 + $0x3c] sm:$0xf]
  %v372 = vunpack.c.l.b16 %v340
  %v373 = vunpack.c.l.b16 %v341
  %v374 = vunpack.c.l.b16 %v342
  %v375 = vunpack.c.l.b16 %v343
  %v376 = vunpack.c.l.b16 %v344
  %v377 = vunpack.c.l.b16 %v345
  %v378 = vunpack.c.l.b16 %v346
  %v379 = vunpack.c.l.b16 %v347
  %v380 = vunpack.c.l.b16 %v348
  %v381 = vunpack.c.l.b16 %v349
  %v382 = vunpack.c.l.b16 %v350
  %v383 = vunpack.c.l.b16 %v351
  %v384 = vunpack.c.l.b16 %v352
  %v385 = vunpack.c.l.b16 %v353
  %v386 = vunpack.c.l.b16 %v354
  %v387 = vunpack.c.l.b16 %v355
  %v388 = vpack.c.b16 %v373, %v372
  %v389 = vpack.c.b16 %v375, %v374
  %v390 = vpack.c.b16 %v377, %v376
  %v391 = vpack.c.b16 %v379, %v378
  %v392 = vpack.c.b16 %v381, %v380
  %v393 = vpack.c.b16 %v383, %v382
  %v394 = vpack.c.b16 %v385, %v384
  %v395 = vpack.c.b16 %v387, %v386
  %404 = vmatprep.subr.bf16.mxu0 0
  %405 = vmatpush1.bf16.msra.mxu0 %v395
  %406 = vmatprep.subr.bf16.mxu0 0
  %407 = vmatpush1.bf16.msra.mxu0 %v394
  %408 = vmatprep.subr.bf16.mxu0 0
  %409 = vmatpush1.bf16.msra.mxu0 %v393
  %410 = vmatprep.subr.bf16.mxu0 0
  %411 = vmatpush1.bf16.msra.mxu0 %v392
  %412 = vmatprep.subr.bf16.mxu0 0
  %413 = vmatpush1.bf16.msra.mxu0 %v391
  %414 = vmatprep.subr.bf16.mxu0 0
  %415 = vmatpush1.bf16.msra.mxu0 %v390
  %416 = vmatprep.subr.bf16.mxu0 0
  %417 = vmatpush1.bf16.msra.mxu0 %v389
  %418 = vmatprep.subr.bf16.mxu0 0
  %419 = vmatpush1.bf16.msra.mxu0 %v388
  %420 = vmatprep.subr.bf16.mxu0 0
  %421 = vmatpush2.bf16.msra.mxu0 0
  %422 = vmatprep.subr.bf16.mxu0 0
  %423 = vmatpush2.bf16.msra.mxu0 0
  %424 = vmatprep.subr.bf16.mxu0 0
  %425 = vmatpush2.bf16.msra.mxu0 0
  %426 = vmatprep.subr.bf16.mxu0 0
  %427 = vmatpush2.bf16.msra.mxu0 0
  %428 = vmatprep.subr.bf16.mxu0 0
  %429 = vmatpush2.bf16.msra.mxu0 0
  %430 = vmatprep.subr.bf16.mxu0 0
  %431 = vmatpush2.bf16.msra.mxu0 0
  %432 = vmatprep.subr.bf16.mxu0 0
  %433 = vmatpush2.bf16.msra.mxu0 0
  %434 = vmatprep.subr.bf16.mxu0 0
  %435 = vmatpush2.bf16.msra.mxu0 0
  %436 = vmatprep.mubr.bf16.mxu0 0
  %437 = vmatmul.mubr.bf16.gmra.mxu0 %v339
  %v438 = vpop.f32.mrf.mxu0
  %v439 = vadd.f32 0.0, %v438
  %v440 = vpop.f32.mrf.mxu0
  %v441 = vpop.f32.mrf.mxu0
  %v442 = vadd.f32 0.0, %v441
  %v443 = vpop.f32.mrf.mxu0
  %444 = vdwg.mxu0
  %v445 = vadd.f32 %v158, %v439
  %v446 = vadd.f32 %v161, %v442
  %v448 = vlaneseq
  %v449 = vshrl.u32 %v448, 7
  %v450 = vsub.s32 0, %v449
  %v451 = vrot.slane %v43, %v450
  %v453 = vadd.f32 %v445, %v451
  %v454 = vadd.f32 %v446, %v451
  %v455 = vpack.c.bf16 %v454, %v453
  %v456 = vld [vmem:[%s9] sm:$0xf]
  %v457 = vld [vmem:[%s9 + $0x4] sm:$0xf]
  %v458 = vld [vmem:[%s9 + $0x8] sm:$0xf]
  %v459 = vld [vmem:[%s9 + $0xc] sm:$0xf]
  %v460 = vld [vmem:[%s9 + $0x10] sm:$0xf]
  %v461 = vld [vmem:[%s9 + $0x14] sm:$0xf]
  %v462 = vld [vmem:[%s9 + $0x18] sm:$0xf]
  %v463 = vld [vmem:[%s9 + $0x1c] sm:$0xf]
  %v464 = vld [vmem:[%s9 + $0x20] sm:$0xf]
  %v465 = vld [vmem:[%s9 + $0x24] sm:$0xf]
  %v466 = vld [vmem:[%s9 + $0x28] sm:$0xf]
  %v467 = vld [vmem:[%s9 + $0x2c] sm:$0xf]
  %v468 = vld [vmem:[%s9 + $0x30] sm:$0xf]
  %v469 = vld [vmem:[%s9 + $0x34] sm:$0xf]
  %v470 = vld [vmem:[%s9 + $0x38] sm:$0xf]
  %v471 = vld [vmem:[%s9 + $0x3c] sm:$0xf]
  %v473 = vlaneseq
  %v474 = vshrl.u32 %v473, 7
  %v475 = vsub.s32 0, %v474
  %v476 = vrot.slane %v44, %v475
  %v494 = vunpack.c.l.b16 %v456
  %v495 = vunpack.c.l.b16 %v457
  %v496 = vunpack.c.l.b16 %v458
  %v497 = vunpack.c.l.b16 %v459
  %v498 = vunpack.c.l.b16 %v460
  %v499 = vunpack.c.l.b16 %v461
  %v500 = vunpack.c.l.b16 %v462
  %v501 = vunpack.c.l.b16 %v463
  %v502 = vunpack.c.l.b16 %v464
  %v503 = vunpack.c.l.b16 %v465
  %v504 = vunpack.c.l.b16 %v466
  %v505 = vunpack.c.l.b16 %v467
  %v506 = vunpack.c.l.b16 %v468
  %v507 = vunpack.c.l.b16 %v469
  %v508 = vunpack.c.l.b16 %v470
  %v509 = vunpack.c.l.b16 %v471
  %v510 = vpack.c.b16 %v495, %v494
  %v511 = vpack.c.b16 %v497, %v496
  %v512 = vpack.c.b16 %v499, %v498
  %v513 = vpack.c.b16 %v501, %v500
  %v514 = vpack.c.b16 %v503, %v502
  %v515 = vpack.c.b16 %v505, %v504
  %v516 = vpack.c.b16 %v507, %v506
  %v517 = vpack.c.b16 %v509, %v508
  %526 = vmatprep.subr.bf16.mxu0 0
  %527 = vmatpush1.bf16.msra.mxu0 %v517
  %528 = vmatprep.subr.bf16.mxu0 0
  %529 = vmatpush1.bf16.msra.mxu0 %v516
  %530 = vmatprep.subr.bf16.mxu0 0
  %531 = vmatpush1.bf16.msra.mxu0 %v515
  %532 = vmatprep.subr.bf16.mxu0 0
  %533 = vmatpush1.bf16.msra.mxu0 %v514
  %534 = vmatprep.subr.bf16.mxu0 0
  %535 = vmatpush1.bf16.msra.mxu0 %v513
  %536 = vmatprep.subr.bf16.mxu0 0
  %537 = vmatpush1.bf16.msra.mxu0 %v512
  %538 = vmatprep.subr.bf16.mxu0 0
  %539 = vmatpush1.bf16.msra.mxu0 %v511
  %540 = vmatprep.subr.bf16.mxu0 0
  %541 = vmatpush1.bf16.msra.mxu0 %v510
  %542 = vmatprep.subr.bf16.mxu0 0
  %543 = vmatpush2.bf16.msra.mxu0 0
  %544 = vmatprep.subr.bf16.mxu0 0
  %545 = vmatpush2.bf16.msra.mxu0 0
  %546 = vmatprep.subr.bf16.mxu0 0
  %547 = vmatpush2.bf16.msra.mxu0 0
  %548 = vmatprep.subr.bf16.mxu0 0
  %549 = vmatpush2.bf16.msra.mxu0 0
  %550 = vmatprep.subr.bf16.mxu0 0
  %551 = vmatpush2.bf16.msra.mxu0 0
  %552 = vmatprep.subr.bf16.mxu0 0
  %553 = vmatpush2.bf16.msra.mxu0 0
  %554 = vmatprep.subr.bf16.mxu0 0
  %555 = vmatpush2.bf16.msra.mxu0 0
  %556 = vmatprep.subr.bf16.mxu0 0
  %557 = vmatpush2.bf16.msra.mxu0 0
  %558 = vmatprep.mubr.bf16.mxu0 0
  %559 = vmatmul.mubr.bf16.gmra.mxu0 %v455
  %v560 = vpop.f32.mrf.mxu0
  %v561 = vadd.f32 %v476, %v560
  %v562 = vpop.f32.mrf.mxu0
  %v563 = vpop.f32.mrf.mxu0
  %v564 = vadd.f32 %v476, %v563
  %v565 = vpop.f32.mrf.mxu0
  %566 = vdwg.mxu0
  %567 = vst [vmem:[%s11] sm:$0xff] %v561
  %568 = vst [vmem:[%s11 + $0x8] sm:$0xff] %v564
  // Predicated region
  $region46: #{sequence_module_forward.1} parent=0 // pred_check
    _
  $region47: #{sequence_module_forward.1} parent=0 // pred_check_branch
    %570 = sbr.rel (0) target = $region49
  $region48: #{sequence_module_forward.1} parent=0 // pred_region
    _
  $region49: #{sequence_module_forward.1} parent=0 // pred_fallthru
    _
  // Predicated region
  $region50: #{sequence_module_forward.1} parent=0 // pred_check
    _
  $region51: #{sequence_module_forward.1} parent=0 // pred_check_branch
    %572 = sbr.rel (0) target = $region53
  $region52: #{sequence_module_forward.1} parent=0 // pred_region
    _
  $region53: #{sequence_module_forward.1} parent=0 // pred_fallthru
    _

</llo_original>
